<compile_context>
chip_gen: v6e
topology: v6e:2x2x1
jax: 0.10.0
libtpu: 0.0.40
codegen_flags: <defaults>
</compile_context>

<pallas_src>
import jax
import jax.numpy as jnp
from jax.experimental import pallas as pl
from jax.experimental.pallas import tpu as pltpu


def _round_up(x, m):
    return (x + m - 1) // m * m


def _vmem_capacity_bytes():
    """Physical VMEM per TensorCore (128 MiB on v5e/v6e, 64 MiB on v7x)."""
    try:
        cap = int(getattr(pltpu.get_tpu_info(), "vmem_capacity_bytes", 0) or 0)
        if cap > 0:
            return cap
    except Exception:
        pass
    return 64 << 20  # conservative default (v7x per-TC)


def _fix_tm(tm, M):
    """Clamp an M-tile to a legal block dim: <= M and (multiple of 8 or == M)."""
    tm = min(tm, M)
    if tm != M and tm % 8:
        tm = min(max(8, (tm // 8) * 8), M)
    return tm


def _patch_embed_kernel(x_ref, w_ref, b_ref, o_ref):
    """o = x @ w + b; full-K contraction, f32 accumulation, bias epilogue."""
    acc = jnp.dot(x_ref[...], w_ref[...], preferred_element_type=jnp.float32)
    o_ref[...] = (acc + b_ref[...]).astype(o_ref.dtype)


def tubelet_matmul(patches, w_flat, bias2d, *, out_dtype, max_tm=1024):
    """patches [M, K] @ w_flat [K, D] + bias2d [1, D] -> [M, D] in out_dtype."""
    M, K = patches.shape
    K2, D = w_flat.shape
    assert K == K2 and bias2d.shape == (1, D)
    in_bytes = jnp.dtype(patches.dtype).itemsize
    out_bytes = jnp.dtype(out_dtype).itemsize

    cap = _vmem_capacity_bytes()
    budget = cap * 3 // 4              # ~48 MiB on v7x, ~96 MiB on v5e/v6e

    # ---- N (feature) tiling: keep the whole weight resident when it fits in
    # half the budget, otherwise tile D by multiples of 128 lanes. -----------
    if K * D * in_bytes <= budget // 2 or D <= 128:
        tn = D
    else:
        tn = (budget // 2) // (K * in_bytes)
        tn = max(128, min(tn // 128 * 128, (D // 128) * 128))
    n_tiles = pl.cdiv(D, tn)

    # ---- M (patch-row) tiling: biggest tile that fits the budget. ----------
    def vmem_est(tm_, w_bufs=1):
        return (2 * tm_ * K * in_bytes          # double-buffered patch tiles
                + w_bufs * K * tn * in_bytes    # weight tile(s)
                + w_bufs * tn * 4               # bias tile(s), f32
                + 2 * tm_ * tn * out_bytes)     # double-buffered output tiles

    tm = _fix_tm(max_tm, M)
    while tm > 8 and vmem_est(tm) > budget:
        tm = _fix_tm(tm // 2, M)
    # Guarantee >= 2 grid steps so the "parallel" axes can span both v7x cores.
    if n_tiles * pl.cdiv(M, tm) < 2 and M >= 16:
        tm = _fix_tm(-(-M // 2), M)
    if vmem_est(tm) > budget:
        # TODO(synk): add a K-tiled accumulator fallback for extremely large K.
        raise ValueError("tubelet_matmul: contraction dim K too large for a "
                         "VMEM-resident weight tile; K-tiling not implemented")
    m_tiles = pl.cdiv(M, tm)

    vmem_limit = int(min(cap - (8 << 20),
                         max(vmem_est(tm, w_bufs=2) + (8 << 20), 32 << 20)))

    def run(single_buffer_weight):
        if single_buffer_weight:
            # Block index is constant over the inner M loop: a second pipeline
            # buffer for weight/bias is pure VMEM waste.
            w_spec = pl.BlockSpec((K, tn), lambda j, i: (0, j),
                                  pipeline_mode=pl.Buffered(1))
            b_spec = pl.BlockSpec((1, tn), lambda j, i: (0, j),
                                  pipeline_mode=pl.Buffered(1))
        else:
            w_spec = pl.BlockSpec((K, tn), lambda j, i: (0, j))
            b_spec = pl.BlockSpec((1, tn), lambda j, i: (0, j))
        return pl.pallas_call(
            _patch_embed_kernel,
            out_shape=jax.ShapeDtypeStruct((M, D), out_dtype),
            grid_spec=pltpu.PrefetchScalarGridSpec(
                num_scalar_prefetch=0,
                # D tiles outermost so the weight block only changes n_tiles
                # times; M tiles stream through it on the inner axis.
                grid=(n_tiles, m_tiles),
                in_specs=[
                    pl.BlockSpec((tm, K), lambda j, i: (i, 0)),  # patch rows
                    w_spec,                                      # weight
                    b_spec,                                      # bias
                ],
                out_specs=pl.BlockSpec((tm, tn), lambda j, i: (i, j)),
            ),
            compiler_params=pltpu.CompilerParams(
                dimension_semantics=("parallel", "parallel"),
                vmem_limit_bytes=vmem_limit,
            ),
        )(patches, w_flat, bias2d)

    try:
        return run(True)
    except Exception:
        # pipeline_mode=pl.Buffered(1) unavailable/rejected on this jax build:
        # fall back to default double buffering (same math, a bit more VMEM).
        return run(False)


def tubelet_embedding_stem(x, conv_weight, conv_bias, *, tubelet_size,
                           patch_size, compute_dtype=jnp.bfloat16,
                           out_dtype=None, max_tm=1024):
    """
    x           : [B, C, T, H, W]   (PyTorch NCDHW convention)
    conv_weight : [D, C, tub, p, p] (PyTorch Conv3d weight layout)
    conv_bias   : [D]
    returns     : [B, N, D] with N = (T//tub)*(H//p)*(W//p)
    """
    B, C, T, H, W = x.shape
    D = conv_weight.shape[0]
    tub, p = tubelet_size, patch_size
    assert H % p == 0 and W % p == 0, "H/W must be divisible by patch_size"
    assert T % tub == 0, "T must be divisible by tubelet_size"
    Tp, Hp, Wp = T // tub, H // p, W // p
    N = Tp * Hp * Wp
    K = C * tub * p * p
    out_dtype = x.dtype if out_dtype is None else out_dtype

    # --- patch extraction: one fused XLA transpose(+cast) pass --------------
    # TODO(synk): fuse this extraction into the kernel (grid over (b, Tp[, Hp])
    # with a BlockSpec on the raw 5-D x plus an in-VMEM relayout, or manual
    # strided make_async_copy with memory_space=pl.ANY) so x is read from HBM
    # exactly once; deferred because the required minor-dim relayout
    # ((C,tub,p,W) -> (rows, K)) is not reliably lowered by Mosaic for
    # arbitrary patch sizes.
    xp = x.reshape(B, C, Tp, tub, Hp, p, Wp, p)
    xp = jnp.transpose(xp, (0, 2, 4, 6, 1, 3, 5, 7))   # (b,tp,hp,wp,c,kt,kh,kw)
    patches = xp.reshape(B * N, K).astype(compute_dtype)

    # Conv3d weight [D, C, tub, p, p] -> [K, D] (matches (c, kt, kh, kw) order);
    # bias -> [1, D] kept in f32 for the epilogue add.
    w_flat = conv_weight.reshape(D, K).T.astype(compute_dtype)
    bias2d = conv_bias.reshape(1, D).astype(jnp.float32)

    out = tubelet_matmul(patches, w_flat, bias2d, out_dtype=out_dtype,
                         max_tm=max_tm)
    return out.reshape(B, N, D)        # leading-dims-only reshape (free)


def _reference(x, conv_weight, conv_bias, *, tubelet_size, patch_size):
    """Pure-JAX reference of the PyTorch forward (lax conv + reshape/permute)."""
    y = jax.lax.conv_general_dilated(
        x, conv_weight,
        window_strides=(tubelet_size, patch_size, patch_size),
        padding="VALID",
        dimension_numbers=("NCDHW", "OIDHW", "NCDHW"),
    )
    y = y + conv_bias.reshape(1, -1, 1, 1, 1)
    B, D = y.shape[0], y.shape[1]
    y = y.reshape(B, D, -1)
    return jnp.transpose(y, (0, 2, 1))


if __name__ == "__main__":
    # Small, self-consistent config:
    #   image_size=16, channels=4, num_frames=8, patch_size=8, dim=32, tubelet=2
    B, C, T, H, W = 2, 4, 8, 16, 16
    patch_size, tubelet_size, dim = 8, 2, 32

    key = jax.random.PRNGKey(0)
    kx, kw, kb = jax.random.split(key, 3)
    x = jax.random.normal(kx, (B, C, T, H, W), dtype=jnp.float32)
    conv_weight = 0.02 * jax.random.normal(
        kw, (dim, C, tubelet_size, patch_size, patch_size), dtype=jnp.float32)
    conv_bias = 0.02 * jax.random.normal(kb, (dim,), dtype=jnp.float32)

    ref = _reference(x, conv_weight, conv_bias,
                     tubelet_size=tubelet_size, patch_size=patch_size)
    N = (T // tubelet_size) * (H // patch_size) * (W // patch_size)

    # Production path: bf16 MXU inputs, f32 accumulation, f32 output.
    out_bf16 = jax.block_until_ready(tubelet_embedding_stem(
        x, conv_weight, conv_bias, tubelet_size=tubelet_size,
        patch_size=patch_size, compute_dtype=jnp.bfloat16))
    assert out_bf16.shape == ref.shape == (B, N, dim)
    assert jnp.allclose(out_bf16, ref, atol=3e-2, rtol=3e-2)

    # Full-f32 path (tight tolerance vs the conv reference).
    out_f32 = jax.block_until_ready(tubelet_embedding_stem(
        x, conv_weight, conv_bias, tubelet_size=tubelet_size,
        patch_size=patch_size, compute_dtype=jnp.float32))
    assert out_f32.shape == ref.shape
    assert jnp.allclose(out_f32, ref, atol=2e-4, rtol=2e-4)

    print("KERNEL_OK")
</pallas_src>

<mosaic_0001>
module attributes {stable_mosaic.version = 11 : i64} {
  func.func @_patch_embed_kernel(%arg0: i32, %arg1: i32, %arg2: memref<16x512xbf16, #tpu.memory_space<vmem>>, %arg3: memref<512x32xbf16, #tpu.memory_space<vmem>>, %arg4: memref<1x32xf32, #tpu.memory_space<vmem>>, %arg5: memref<16x32xf32, #tpu.memory_space<vmem>>) attributes {dimension_semantics = [#tpu.dimension_semantics<parallel>, #tpu.dimension_semantics<parallel>], iteration_bounds = array<i64: 1, 2>, scalar_prefetch = 0 : i64, scratch_operands = 0 : i64, tpu.core_type = #tpu.core_type<tc>, window_params = [{transform_indices = @transform_0, window_bounds = array<i64: 16, 512>}, {pipeline_mode = #tpu.pipeline_mode<synchronous>, transform_indices = @transform_1, window_bounds = array<i64: 512, 32>}, {pipeline_mode = #tpu.pipeline_mode<synchronous>, transform_indices = @transform_2, window_bounds = array<i64: 1, 32>}, {transform_indices = @transform_3, window_bounds = array<i64: 16, 32>}]} {
    %c0 = arith.constant 0 : index
    %c0_0 = arith.constant 0 : index
    %0 = vector.load %arg2[%c0, %c0_0] : memref<16x512xbf16, #tpu.memory_space<vmem>>, vector<16x512xbf16>
    %c0_1 = arith.constant 0 : index
    %c0_2 = arith.constant 0 : index
    %1 = vector.load %arg3[%c0_1, %c0_2] : memref<512x32xbf16, #tpu.memory_space<vmem>>, vector<512x32xbf16>
    %cst = arith.constant dense<0.000000e+00> : vector<16x32xf32>
    %2 = tpu.matmul %0, %1, %cst {dimension_numbers = #tpu.dot_dimension_numbers<[1], [0], [0], [1], [0, 0, 1, 1], [], []>} : vector<16x512xbf16>, vector<512x32xbf16>, vector<16x32xf32> -> vector<16x32xf32>
    %c0_3 = arith.constant 0 : index
    %c0_4 = arith.constant 0 : index
    %3 = vector.load %arg4[%c0_3, %c0_4] : memref<1x32xf32, #tpu.memory_space<vmem>>, vector<1x32xf32>
    %4 = vector.broadcast %3 : vector<1x32xf32> to vector<16x32xf32>
    %5 = arith.addf %2, %4 : vector<16x32xf32>
    %c0_5 = arith.constant 0 : index
    %c0_6 = arith.constant 0 : index
    %6 = vector.load %arg5[%c0_5, %c0_6] : memref<16x32xf32, #tpu.memory_space<vmem>>, vector<16x32xf32>
    tpu.vector_store %arg5[%c0_5, %c0_6], %5 {strides = array<i32>} : memref<16x32xf32, #tpu.memory_space<vmem>>, vector<16x32xf32>,
    return
  }
  func.func @transform_0(%arg0: i32, %arg1: i32) -> (i32, i32) {
    %c0_i32 = arith.constant 0 : i32
    %c0_i32_0 = arith.constant 0 : i32
    return %arg1, %c0_i32 : i32, i32
  }
  func.func @transform_1(%arg0: i32, %arg1: i32) -> (i32, i32) {
    %c0_i32 = arith.constant 0 : i32
    %c0_i32_0 = arith.constant 0 : i32
    return %c0_i32, %arg0 : i32, i32
  }
  func.func @transform_2(%arg0: i32, %arg1: i32) -> (i32, i32) {
    %c0_i32 = arith.constant 0 : i32
    %c0_i32_0 = arith.constant 0 : i32
    return %c0_i32, %arg0 : i32, i32
  }
  func.func @transform_3(%arg0: i32, %arg1: i32) -> (i32, i32) {
    %c0_i32 = arith.constant 0 : i32
    return %arg1, %arg0 : i32, i32
  }
}

module attributes {stable_mosaic.version = 11 : i64} {
  func.func @_patch_embed_kernel(%arg0: i32, %arg1: i32, %arg2: memref<16x512xbf16, #tpu.memory_space<vmem>>, %arg3: memref<512x32xbf16, #tpu.memory_space<vmem>>, %arg4: memref<1x32xf32, #tpu.memory_space<vmem>>, %arg5: memref<16x32xf32, #tpu.memory_space<vmem>>) attributes {dimension_semantics = [#tpu.dimension_semantics<parallel>, #tpu.dimension_semantics<parallel>], iteration_bounds = array<i64: 1, 2>, scalar_prefetch = 0 : i64, scratch_operands = 0 : i64, tpu.core_type = #tpu.core_type<tc>, window_params = [{transform_indices = @transform_0, window_bounds = array<i64: 16, 512>}, {transform_indices = @transform_1, window_bounds = array<i64: 512, 32>}, {transform_indices = @transform_2, window_bounds = array<i64: 1, 32>}, {transform_indices = @transform_3, window_bounds = array<i64: 16, 32>}]} {
    %c0 = arith.constant 0 : index
    %c0_0 = arith.constant 0 : index
    %0 = vector.load %arg2[%c0, %c0_0] : memref<16x512xbf16, #tpu.memory_space<vmem>>, vector<16x512xbf16>
    %c0_1 = arith.constant 0 : index
    %c0_2 = arith.constant 0 : index
    %1 = vector.load %arg3[%c0_1, %c0_2] : memref<512x32xbf16, #tpu.memory_space<vmem>>, vector<512x32xbf16>
    %cst = arith.constant dense<0.000000e+00> : vector<16x32xf32>
    %2 = tpu.matmul %0, %1, %cst {dimension_numbers = #tpu.dot_dimension_numbers<[1], [0], [0], [1], [0, 0, 1, 1], [], []>} : vector<16x512xbf16>, vector<512x32xbf16>, vector<16x32xf32> -> vector<16x32xf32>
    %c0_3 = arith.constant 0 : index
    %c0_4 = arith.constant 0 : index
    %3 = vector.load %arg4[%c0_3, %c0_4] : memref<1x32xf32, #tpu.memory_space<vmem>>, vector<1x32xf32>
    %4 = vector.broadcast %3 : vector<1x32xf32> to vector<16x32xf32>
    %5 = arith.addf %2, %4 : vector<16x32xf32>
    %c0_5 = arith.constant 0 : index
    %c0_6 = arith.constant 0 : index
    %6 = vector.load %arg5[%c0_5, %c0_6] : memref<16x32xf32, #tpu.memory_space<vmem>>, vector<16x32xf32>
    tpu.vector_store %arg5[%c0_5, %c0_6], %5 {strides = array<i32>} : memref<16x32xf32, #tpu.memory_space<vmem>>, vector<16x32xf32>,
    return
  }
  func.func @transform_0(%arg0: i32, %arg1: i32) -> (i32, i32) {
    %c0_i32 = arith.constant 0 : i32
    %c0_i32_0 = arith.constant 0 : i32
    return %arg1, %c0_i32 : i32, i32
  }
  func.func @transform_1(%arg0: i32, %arg1: i32) -> (i32, i32) {
    %c0_i32 = arith.constant 0 : i32
    %c0_i32_0 = arith.constant 0 : i32
    return %c0_i32, %arg0 : i32, i32
  }
  func.func @transform_2(%arg0: i32, %arg1: i32) -> (i32, i32) {
    %c0_i32 = arith.constant 0 : i32
    %c0_i32_0 = arith.constant 0 : i32
    return %c0_i32, %arg0 : i32, i32
  }
  func.func @transform_3(%arg0: i32, %arg1: i32) -> (i32, i32) {
    %c0_i32 = arith.constant 0 : i32
    return %arg1, %arg0 : i32, i32
  }
}

</mosaic_0001>

<llo_original>
// kernel: tpu_custom_call.1
$region0: #{tpu_custom_call.1}
  #allocation0 [shape = 'u32[]', space=smem, size = 0x4, offset = 0x4, fixed_abs, tag = 'smem constant byte address 0x4 - core index']
  #allocation1 [shape = 'u32[144,128]{1,0:T(1,128)}', space=vmem, size = 0x12000, scoped, tag = 'internal scratch']
  %s0 = inlined_call_operand.vmem [shape: bf16[32,512], index: 0, kind: input, shape index: {}]
  %s1 = inlined_call_operand.vmem [shape: bf16[512,32], index: 1, kind: input, shape index: {}]
  %s2 = inlined_call_operand.vmem [shape: f32[1,32], index: 2, kind: input, shape index: {}]
  %s3 = inlined_call_operand.hbm [shape: f32[32,32], index: 3, kind: output, shape index: {}]
  %s4 = sld [smem:[#allocation0]]
  $region45: #{tpu_custom_call.1} parent=0
    _
  %s6 = ssub.s32 1, %s4
  %s7 = scalar_select 0, %s6, %s4
  $region1: #{tpu_custom_call.1} parent=0
    #allocation2 [shape = 'u8[16384]{0}', space=vmem, size = 0x4000, scoped, tag = 'output window, operand 0']
    #allocation3 [shape = 's32[2]{0}', space=sflag, size = 0x8, scoped, tag = 'scoped memory for tpu_custom_call.1']
    %8 = vsyncpa [#allocation3], 0
    %s9 = scalar_lea.sflag [#allocation3], 1
    %10 = vsyncpa %s9, 0
    loop: start=0, step=1, limit=4
    $region2: #{tpu_custom_call.1} parent=1 // loop_pre_header
      _
    $region3: #{tpu_custom_call.1} parent=1 // loop_header
      %s12 = sphi 0, %s16
      %p13 = scmp.ge.s32.totalorder %s12, 4
      %s19 = sphi 0, %s31
      %s20 = sphi 0, %s27
      %s21 = sphi 0, %s19
      %s22 = sphi 0, %s20
      %s23 = sphi 0, %s21
      %s24 = sphi 0, %s22
      %s34 = sphi 0, %s36
      %s37 = sphi 0, %s34
      %s38 = sphi 0, %s37
      %s54 = sphi 0, %s38
      %s60 = sphi 0, %s62
      %s63 = sphi 0, %s60
      %s64 = sphi 0, %s63
      %s80 = sphi 0, %s64
      %s86 = sphi 0, %s88
      %s89 = sphi 0, %s86
      %s90 = sphi 0, %s89
      %s106 = sphi 0, %s90
      %s114 = sphi 0, %s116
      %s117 = sphi 0, %s114
      %s118 = sphi 0, %s117
      %s134 = sphi 0, %s118
    $region4: #{tpu_custom_call.1} parent=1 // loop_header_branch
      %15 = sbr.rel (%p13) target = $region8
    $region5: #{tpu_custom_call.1} parent=1 // loop_body
      %s17 = ssub.s32 %s12, 1
      %s18 = ssub.s32 %s12, 2
      %s25 = sadd.s32 1, %s20
      %p26 = scmp.ge.s32.totalorder %s25, 2
      %s27 = scalar_select %p26, 0, %s25
      %s28 = sadd.s32 1, %s19
      %s29 = scalar_select %p26, %s28, %s19
      %p30 = scmp.ge.s32.totalorder %s29, 1
      %s31 = scalar_select %p30, 0, %s29
      %s32 = ssub.s32 %s20, %s27
      %p33 = scmp.eq.s32.totalorder %s32, 0
      %s35 = sadd.s32 %s34, 1
      %s36 = scalar_select %p33, %s34, %s35
      %p39 = pneg %p33
      %p40 = scmp.eq.s32.totalorder %s12, 1
      %p41 = por %p39, %p40
      %p42 = scmp.ne.s32.totalorder %s34, %s37
      %p43 = scmp.eq.s32.totalorder %s12, 0
      %p44 = por %p42, %p43
      %p45 = scmp.ne.s32.totalorder %s34, %s37
      %p46 = scmp.eq.s32.totalorder %s17, 1
      %p47 = por %p45, %p46
      %p48 = scmp.ne.s32.totalorder %s37, %s38
      %p49 = scmp.eq.s32.totalorder %s17, 0
      %p50 = por %p48, %p49
      %p51 = scmp.ne.s32.totalorder %s37, %s38
      %p52 = scmp.eq.s32.totalorder %s18, 1
      %p53 = por %p51, %p52
      %p55 = scmp.ne.s32.totalorder %s38, %s54
      %p56 = scmp.eq.s32.totalorder %s18, 0
      %p57 = por %p55, %p56
      %s58 = ssub.s32 %s19, %s31
      %p59 = scmp.eq.s32.totalorder %s58, 0
      %s61 = sadd.s32 %s60, 1
      %s62 = scalar_select %p59, %s60, %s61
      %p65 = pneg %p59
      %p66 = scmp.eq.s32.totalorder %s12, 1
      %p67 = por %p65, %p66
      %p68 = scmp.ne.s32.totalorder %s60, %s63
      %p69 = scmp.eq.s32.totalorder %s12, 0
      %p70 = por %p68, %p69
      %p71 = scmp.ne.s32.totalorder %s60, %s63
      %p72 = scmp.eq.s32.totalorder %s17, 1
      %p73 = por %p71, %p72
      %p74 = scmp.ne.s32.totalorder %s63, %s64
      %p75 = scmp.eq.s32.totalorder %s17, 0
      %p76 = por %p74, %p75
      %p77 = scmp.ne.s32.totalorder %s63, %s64
      %p78 = scmp.eq.s32.totalorder %s18, 1
      %p79 = por %p77, %p78
      %p81 = scmp.ne.s32.totalorder %s64, %s80
      %p82 = scmp.eq.s32.totalorder %s18, 0
      %p83 = por %p81, %p82
      %s84 = ssub.s32 %s19, %s31
      %p85 = scmp.eq.s32.totalorder %s84, 0
      %s87 = sadd.s32 %s86, 1
      %s88 = scalar_select %p85, %s86, %s87
      %p91 = pneg %p85
      %p92 = scmp.eq.s32.totalorder %s12, 1
      %p93 = por %p91, %p92
      %p94 = scmp.ne.s32.totalorder %s86, %s89
      %p95 = scmp.eq.s32.totalorder %s12, 0
      %p96 = por %p94, %p95
      %p97 = scmp.ne.s32.totalorder %s86, %s89
      %p98 = scmp.eq.s32.totalorder %s17, 1
      %p99 = por %p97, %p98
      %p100 = scmp.ne.s32.totalorder %s89, %s90
      %p101 = scmp.eq.s32.totalorder %s17, 0
      %p102 = por %p100, %p101
      %p103 = scmp.ne.s32.totalorder %s89, %s90
      %p104 = scmp.eq.s32.totalorder %s18, 1
      %p105 = por %p103, %p104
      %p107 = scmp.ne.s32.totalorder %s90, %s106
      %p108 = scmp.eq.s32.totalorder %s18, 0
      %p109 = por %p107, %p108
      %s110 = ssub.s32 %s20, %s27
      %s111 = ssub.s32 %s19, %s31
      %s112 = sor.u32 %s110, %s111
      %p113 = scmp.eq.s32.totalorder %s112, 0
      %s115 = sadd.s32 %s114, 1
      %s116 = scalar_select %p113, %s114, %s115
      %p119 = pneg %p113
      %p120 = scmp.eq.s32.totalorder %s12, 1
      %p121 = por %p119, %p120
      %p122 = scmp.ne.s32.totalorder %s114, %s117
      %p123 = scmp.eq.s32.totalorder %s12, 0
      %p124 = por %p122, %p123
      %p125 = scmp.ne.s32.totalorder %s114, %s117
      %p126 = scmp.eq.s32.totalorder %s17, 1
      %p127 = por %p125, %p126
      %p128 = scmp.ne.s32.totalorder %s117, %s118
      %p129 = scmp.eq.s32.totalorder %s17, 0
      %p130 = por %p128, %p129
      %p131 = scmp.ne.s32.totalorder %s117, %s118
      %p132 = scmp.eq.s32.totalorder %s18, 1
      %p133 = por %p131, %p132
      %p135 = scmp.ne.s32.totalorder %s118, %s134
      %p136 = scmp.eq.s32.totalorder %s18, 0
      %p137 = por %p135, %p136
      %p138 = scmp.le.s32.totalorder 1, %s12
      %p139 = scmp.lt.s32.totalorder %s12, 3
      %p140 = pnand %p138, %p139
      %p141 = pneg %p140
      // Predicated region
      $region9: #{tpu_custom_call.1} parent=5 // pred_check
        _
      $region10: #{tpu_custom_call.1} parent=5 // pred_check_branch
        %143 = sbr.rel (%p140) target = $region12
      $region11: #{tpu_custom_call.1} parent=5 // pred_region
        %s144 = ssub.s32 %s12, 1
        // Predicated region
        $region13: #{tpu_custom_call.1} parent=11 // pred_check
          %p145 = pneg %p76
        $region14: #{tpu_custom_call.1} parent=11 // pred_check_branch
          %147 = sbr.rel (%p145) target = $region16
        $region15: #{tpu_custom_call.1} parent=11 // pred_region
          %p148 = scmp.lt.s32.totalorder %s21, 0
          %s149 = scalar_select %p148, %s21, 0
          %s150 = smul.addr %s149, 4
          %s151 = scalar_lea.vmem %s1, %s150
        $region16: #{tpu_custom_call.1} parent=11 // pred_fallthru
          _
        // Predicated region
        $region17: #{tpu_custom_call.1} parent=11 // pred_check
          %p152 = pneg %p102
        $region18: #{tpu_custom_call.1} parent=11 // pred_check_branch
          %154 = sbr.rel (%p152) target = $region20
        $region19: #{tpu_custom_call.1} parent=11 // pred_region
          %p155 = scmp.lt.s32.totalorder %s21, 0
          %s156 = scalar_select %p155, %s21, 0
          %s157 = scalar_lea.vmem %s2, %s156
        $region20: #{tpu_custom_call.1} parent=11 // pred_fallthru
          _
      $region12: #{tpu_custom_call.1} parent=5 // pred_fallthru
        _
      %p158 = scmp.lt.s32.totalorder %s12, 2
      // Predicated region
      $region21: #{tpu_custom_call.1} parent=5 // pred_check
        %p159 = pneg %p158
      $region22: #{tpu_custom_call.1} parent=5 // pred_check_branch
        %161 = sbr.rel (%p159) target = $region24
      $region23: #{tpu_custom_call.1} parent=5 // pred_region
        // Predicated region
        $region25: #{tpu_custom_call.1} parent=23 // pred_check
          %p162 = pneg %p44
        $region26: #{tpu_custom_call.1} parent=23 // pred_check_branch
          %164 = sbr.rel (%p162) target = $region28
        $region27: #{tpu_custom_call.1} parent=23 // pred_region
          %s165 = smul.u32 2, %s20
          %p166 = scmp.lt.s32.totalorder %s165, 3
          %s167 = scalar_select %p166, %s165, 3
          %s168 = smul.addr %s167, 4
          %s169 = smul.addr %s168, 4
          %s170 = scalar_lea.vmem %s0, %s169
          %s171 = smul.u32 2, %s20
        $region28: #{tpu_custom_call.1} parent=23 // pred_fallthru
          _
      $region24: #{tpu_custom_call.1} parent=5 // pred_fallthru
        _
      %p172 = scmp.le.s32.totalorder 1, %s12
      %p173 = scmp.lt.s32.totalorder %s12, 3
      %p174 = pnand %p172, %p173
      %p175 = pneg %p174
      // Predicated region
      $region29: #{tpu_custom_call.1} parent=5 // pred_check
        _
      $region30: #{tpu_custom_call.1} parent=5 // pred_check_branch
        %177 = sbr.rel (%p174) target = $region32
      $region31: #{tpu_custom_call.1} parent=5 // pred_region
        %s178 = ssub.s32 %s12, 1
        %s179 = smul.u32 2, %s22
        %p180 = scmp.lt.s32.totalorder %s179, 3
        %s181 = scalar_select %p180, %s179, 3
        %s182 = smul.addr %s181, 4
        %s183 = smul.addr %s182, 4
        %s184 = scalar_lea.vmem %s0, %s183
        %p185 = pneg %p50
        %p186 = pneg %p47
        %p187 = scmp.lt.s32.totalorder %s21, 0
        %s188 = scalar_select %p187, %s21, 0
        %s189 = smul.addr %s188, 4
        %s190 = scalar_lea.vmem %s1, %s189
        %p191 = pneg %p76
        %p192 = pneg %p73
        %p193 = scmp.lt.s32.totalorder %s21, 0
        %s194 = scalar_select %p193, %s21, 0
        %s195 = scalar_lea.vmem %s2, %s194
        %p196 = pneg %p102
        %p197 = pneg %p99
        %p198 = pneg %p130
        %p199 = pneg %p127
        %s200 = sand.u32 %s117, 1
        %s201 = scalar_lea.sflag [#allocation3], %s200
        %s202 = sand.u32 %s117, 1
        %s203 = smul.addr %s202, 16
        %s204 = scalar_lea.vmem [#allocation2], %s203
        %s205 = smul.u32 2, %s22
        %p206 = scmp.lt.s32.totalorder %s205, 3
        %s207 = scalar_select %p206, %s205, 3
        %s208 = smul.addr %s207, 4
        %s209 = smul.addr %s208, 4
        %s210 = scalar_lea.vmem %s0, %s209
        %s211 = smul.u32 2, %s22
        %p212 = scmp.lt.s32.totalorder %s21, 0
        %s213 = scalar_select %p212, %s21, 0
        %s214 = smul.addr %s213, 4
        %s215 = scalar_lea.vmem %s1, %s214
        %p216 = scmp.lt.s32.totalorder %s21, 0
        %s217 = scalar_select %p216, %s21, 0
        %s218 = scalar_lea.vmem %s2, %s217
        %s219 = smul.u32 2, %s22
        %v221 = vld [vmem:[%s210] sm:$0xff]
        %v222 = vld [vmem:[%s210 + $0x8] sm:$0xff]
        %v223 = vld [vmem:[%s210 + $0x10] sm:$0xff]
        %v224 = vld [vmem:[%s210 + $0x18] sm:$0xff]
        %v225 = vld [vmem:[%s215] sm:$0xf]
        %v226 = vld [vmem:[%s215 + $0x4] sm:$0xf]
        %v227 = vld [vmem:[%s215 + $0x8] sm:$0xf]
        %v228 = vld [vmem:[%s215 + $0xc] sm:$0xf]
        %v229 = vld [vmem:[%s215 + $0x10] sm:$0xf]
        %v230 = vld [vmem:[%s215 + $0x14] sm:$0xf]
        %v231 = vld [vmem:[%s215 + $0x18] sm:$0xf]
        %v232 = vld [vmem:[%s215 + $0x1c] sm:$0xf]
        %v233 = vld [vmem:[%s215 + $0x20] sm:$0xf]
        %v234 = vld [vmem:[%s215 + $0x24] sm:$0xf]
        %v235 = vld [vmem:[%s215 + $0x28] sm:$0xf]
        %v236 = vld [vmem:[%s215 + $0x2c] sm:$0xf]
        %v237 = vld [vmem:[%s215 + $0x30] sm:$0xf]
        %v238 = vld [vmem:[%s215 + $0x34] sm:$0xf]
        %v239 = vld [vmem:[%s215 + $0x38] sm:$0xf]
        %v240 = vld [vmem:[%s215 + $0x3c] sm:$0xf]
        %v241 = vld [vmem:[%s215 + $0x40] sm:$0xf]
        %v242 = vld [vmem:[%s215 + $0x44] sm:$0xf]
        %v243 = vld [vmem:[%s215 + $0x48] sm:$0xf]
        %v244 = vld [vmem:[%s215 + $0x4c] sm:$0xf]
        %v245 = vld [vmem:[%s215 + $0x50] sm:$0xf]
        %v246 = vld [vmem:[%s215 + $0x54] sm:$0xf]
        %v247 = vld [vmem:[%s215 + $0x58] sm:$0xf]
        %v248 = vld [vmem:[%s215 + $0x5c] sm:$0xf]
        %v249 = vld [vmem:[%s215 + $0x60] sm:$0xf]
        %v250 = vld [vmem:[%s215 + $0x64] sm:$0xf]
        %v251 = vld [vmem:[%s215 + $0x68] sm:$0xf]
        %v252 = vld [vmem:[%s215 + $0x6c] sm:$0xf]
        %v253 = vld [vmem:[%s215 + $0x70] sm:$0xf]
        %v254 = vld [vmem:[%s215 + $0x74] sm:$0xf]
        %v255 = vld [vmem:[%s215 + $0x78] sm:$0xf]
        %v256 = vld [vmem:[%s215 + $0x7c] sm:$0xf]
        %v257 = vld [vmem:[%s215 + $0x80] sm:$0xf]
        %v258 = vld [vmem:[%s215 + $0x84] sm:$0xf]
        %v259 = vld [vmem:[%s215 + $0x88] sm:$0xf]
        %v260 = vld [vmem:[%s215 + $0x8c] sm:$0xf]
        %v261 = vld [vmem:[%s215 + $0x90] sm:$0xf]
        %v262 = vld [vmem:[%s215 + $0x94] sm:$0xf]
        %v263 = vld [vmem:[%s215 + $0x98] sm:$0xf]
        %v264 = vld [vmem:[%s215 + $0x9c] sm:$0xf]
        %v265 = vld [vmem:[%s215 + $0xa0] sm:$0xf]
        %v266 = vld [vmem:[%s215 + $0xa4] sm:$0xf]
        %v267 = vld [vmem:[%s215 + $0xa8] sm:$0xf]
        %v268 = vld [vmem:[%s215 + $0xac] sm:$0xf]
        %v269 = vld [vmem:[%s215 + $0xb0] sm:$0xf]
        %v270 = vld [vmem:[%s215 + $0xb4] sm:$0xf]
        %v271 = vld [vmem:[%s215 + $0xb8] sm:$0xf]
        %v272 = vld [vmem:[%s215 + $0xbc] sm:$0xf]
        %v273 = vld [vmem:[%s215 + $0xc0] sm:$0xf]
        %v274 = vld [vmem:[%s215 + $0xc4] sm:$0xf]
        %v275 = vld [vmem:[%s215 + $0xc8] sm:$0xf]
        %v276 = vld [vmem:[%s215 + $0xcc] sm:$0xf]
        %v277 = vld [vmem:[%s215 + $0xd0] sm:$0xf]
        %v278 = vld [vmem:[%s215 + $0xd4] sm:$0xf]
        %v279 = vld [vmem:[%s215 + $0xd8] sm:$0xf]
        %v280 = vld [vmem:[%s215 + $0xdc] sm:$0xf]
        %v281 = vld [vmem:[%s215 + $0xe0] sm:$0xf]
        %v282 = vld [vmem:[%s215 + $0xe4] sm:$0xf]
        %v283 = vld [vmem:[%s215 + $0xe8] sm:$0xf]
        %v284 = vld [vmem:[%s215 + $0xec] sm:$0xf]
        %v285 = vld [vmem:[%s215 + $0xf0] sm:$0xf]
        %v286 = vld [vmem:[%s215 + $0xf4] sm:$0xf]
        %v287 = vld [vmem:[%s215 + $0xf8] sm:$0xf]
        %v288 = vld [vmem:[%s215 + $0xfc] sm:$0xf]
        %v289 = vld [vmem:[%s218] sm:$0x1]
        %v291 = vlaneseq
        %v292 = vshrl.u32 %v291, 7
        %v293 = vsub.s32 0, %v292
        %v294 = vrot.slane %v289, %v293
        %v300 = vunpack.c.l.b16 %v221
        %v301 = vunpack.c.h.b16 %v221
        %v302 = vunpack.c.l.b16 %v222
        %v303 = vunpack.c.h.b16 %v222
        %v304 = vunpack.c.l.b16 %v223
        %v305 = vunpack.c.h.b16 %v223
        %v306 = vunpack.c.l.b16 %v224
        %v307 = vunpack.c.h.b16 %v224
        %v308 = vpack.c.b16 %v304, %v300
        %v309 = vpack.c.b16 %v305, %v301
        %v310 = vpack.c.b16 %v306, %v302
        %v311 = vpack.c.b16 %v307, %v303
        %v380 = vunpack.c.l.b16 %v225
        %v381 = vunpack.c.l.b16 %v226
        %v382 = vunpack.c.l.b16 %v227
        %v383 = vunpack.c.l.b16 %v228
        %v384 = vunpack.c.l.b16 %v229
        %v385 = vunpack.c.l.b16 %v230
        %v386 = vunpack.c.l.b16 %v231
        %v387 = vunpack.c.l.b16 %v232
        %v388 = vunpack.c.l.b16 %v233
        %v389 = vunpack.c.l.b16 %v234
        %v390 = vunpack.c.l.b16 %v235
        %v391 = vunpack.c.l.b16 %v236
        %v392 = vunpack.c.l.b16 %v237
        %v393 = vunpack.c.l.b16 %v238
        %v394 = vunpack.c.l.b16 %v239
        %v395 = vunpack.c.l.b16 %v240
        %v396 = vunpack.c.l.b16 %v241
        %v397 = vunpack.c.l.b16 %v242
        %v398 = vunpack.c.l.b16 %v243
        %v399 = vunpack.c.l.b16 %v244
        %v400 = vunpack.c.l.b16 %v245
        %v401 = vunpack.c.l.b16 %v246
        %v402 = vunpack.c.l.b16 %v247
        %v403 = vunpack.c.l.b16 %v248
        %v404 = vunpack.c.l.b16 %v249
        %v405 = vunpack.c.l.b16 %v250
        %v406 = vunpack.c.l.b16 %v251
        %v407 = vunpack.c.l.b16 %v252
        %v408 = vunpack.c.l.b16 %v253
        %v409 = vunpack.c.l.b16 %v254
        %v410 = vunpack.c.l.b16 %v255
        %v411 = vunpack.c.l.b16 %v256
        %v412 = vunpack.c.l.b16 %v257
        %v413 = vunpack.c.l.b16 %v258
        %v414 = vunpack.c.l.b16 %v259
        %v415 = vunpack.c.l.b16 %v260
        %v416 = vunpack.c.l.b16 %v261
        %v417 = vunpack.c.l.b16 %v262
        %v418 = vunpack.c.l.b16 %v263
        %v419 = vunpack.c.l.b16 %v264
        %v420 = vunpack.c.l.b16 %v265
        %v421 = vunpack.c.l.b16 %v266
        %v422 = vunpack.c.l.b16 %v267
        %v423 = vunpack.c.l.b16 %v268
        %v424 = vunpack.c.l.b16 %v269
        %v425 = vunpack.c.l.b16 %v270
        %v426 = vunpack.c.l.b16 %v271
        %v427 = vunpack.c.l.b16 %v272
        %v428 = vunpack.c.l.b16 %v273
        %v429 = vunpack.c.l.b16 %v274
        %v430 = vunpack.c.l.b16 %v275
        %v431 = vunpack.c.l.b16 %v276
        %v432 = vunpack.c.l.b16 %v277
        %v433 = vunpack.c.l.b16 %v278
        %v434 = vunpack.c.l.b16 %v279
        %v435 = vunpack.c.l.b16 %v280
        %v436 = vunpack.c.l.b16 %v281
        %v437 = vunpack.c.l.b16 %v282
        %v438 = vunpack.c.l.b16 %v283
        %v439 = vunpack.c.l.b16 %v284
        %v440 = vunpack.c.l.b16 %v285
        %v441 = vunpack.c.l.b16 %v286
        %v442 = vunpack.c.l.b16 %v287
        %v443 = vunpack.c.l.b16 %v288
        %v444 = vpack.c.b16 %v381, %v380
        %v445 = vpack.c.b16 %v383, %v382
        %v446 = vpack.c.b16 %v385, %v384
        %v447 = vpack.c.b16 %v387, %v386
        %v448 = vpack.c.b16 %v389, %v388
        %v449 = vpack.c.b16 %v391, %v390
        %v450 = vpack.c.b16 %v393, %v392
        %v451 = vpack.c.b16 %v395, %v394
        %v452 = vpack.c.b16 %v397, %v396
        %v453 = vpack.c.b16 %v399, %v398
        %v454 = vpack.c.b16 %v401, %v400
        %v455 = vpack.c.b16 %v403, %v402
        %v456 = vpack.c.b16 %v405, %v404
        %v457 = vpack.c.b16 %v407, %v406
        %v458 = vpack.c.b16 %v409, %v408
        %v459 = vpack.c.b16 %v411, %v410
        %v460 = vpack.c.b16 %v413, %v412
        %v461 = vpack.c.b16 %v415, %v414
        %v462 = vpack.c.b16 %v417, %v416
        %v463 = vpack.c.b16 %v419, %v418
        %v464 = vpack.c.b16 %v421, %v420
        %v465 = vpack.c.b16 %v423, %v422
        %v466 = vpack.c.b16 %v425, %v424
        %v467 = vpack.c.b16 %v427, %v426
        %v468 = vpack.c.b16 %v429, %v428
        %v469 = vpack.c.b16 %v431, %v430
        %v470 = vpack.c.b16 %v433, %v432
        %v471 = vpack.c.b16 %v435, %v434
        %v472 = vpack.c.b16 %v437, %v436
        %v473 = vpack.c.b16 %v439, %v438
        %v474 = vpack.c.b16 %v441, %v440
        %v475 = vpack.c.b16 %v443, %v442
        %508 = vmatprep.subr.bf16.mxu0 0
        %509 = vmatpush1.bf16.msra.mxu0 %v451
        %510 = vmatprep.subr.bf16.mxu0 0
        %511 = vmatpush1.bf16.msra.mxu0 %v450
        %512 = vmatprep.subr.bf16.mxu0 0
        %513 = vmatpush1.bf16.msra.mxu0 %v449
        %514 = vmatprep.subr.bf16.mxu0 0
        %515 = vmatpush1.bf16.msra.mxu0 %v448
        %516 = vmatprep.subr.bf16.mxu0 0
        %517 = vmatpush1.bf16.msra.mxu0 %v447
        %518 = vmatprep.subr.bf16.mxu0 0
        %519 = vmatpush1.bf16.msra.mxu0 %v446
        %520 = vmatprep.subr.bf16.mxu0 0
        %521 = vmatpush1.bf16.msra.mxu0 %v445
        %522 = vmatprep.subr.bf16.mxu0 0
        %523 = vmatpush1.bf16.msra.mxu0 %v444
        %524 = vmatprep.subr.bf16.mxu0 0
        %525 = vmatpush2.bf16.msra.mxu0 %v459
        %526 = vmatprep.subr.bf16.mxu0 0
        %527 = vmatpush2.bf16.msra.mxu0 %v458
        %528 = vmatprep.subr.bf16.mxu0 0
        %529 = vmatpush2.bf16.msra.mxu0 %v457
        %530 = vmatprep.subr.bf16.mxu0 0
        %531 = vmatpush2.bf16.msra.mxu0 %v456
        %532 = vmatprep.subr.bf16.mxu0 0
        %533 = vmatpush2.bf16.msra.mxu0 %v455
        %534 = vmatprep.subr.bf16.mxu0 0
        %535 = vmatpush2.bf16.msra.mxu0 %v454
        %536 = vmatprep.subr.bf16.mxu0 0
        %537 = vmatpush2.bf16.msra.mxu0 %v453
        %538 = vmatprep.subr.bf16.mxu0 0
        %539 = vmatpush2.bf16.msra.mxu0 %v452
        %540 = vmatprep.mubr.bf16.mxu0 %v309
        %541 = vmatmul.mubr.bf16.gmra.mxu0 %v308
        %v542 = vpop.f32.mrf.mxu0
        %v543 = vadd.f32 %v294, %v542
        %v544 = vpop.f32.mrf.mxu0
        %v545 = vpop.f32.mrf.mxu0
        %v546 = vadd.f32 %v294, %v545
        %v547 = vpop.f32.mrf.mxu0
        %548 = vdwg.mxu0
        %549 = vmatprep.subr.bf16.mxu0 0
        %550 = vmatpush1.bf16.msra.mxu0 %v467
        %551 = vmatprep.subr.bf16.mxu0 0
        %552 = vmatpush1.bf16.msra.mxu0 %v466
        %553 = vmatprep.subr.bf16.mxu0 0
        %554 = vmatpush1.bf16.msra.mxu0 %v465
        %555 = vmatprep.subr.bf16.mxu0 0
        %556 = vmatpush1.bf16.msra.mxu0 %v464
        %557 = vmatprep.subr.bf16.mxu0 0
        %558 = vmatpush1.bf16.msra.mxu0 %v463
        %559 = vmatprep.subr.bf16.mxu0 0
        %560 = vmatpush1.bf16.msra.mxu0 %v462
        %561 = vmatprep.subr.bf16.mxu0 0
        %562 = vmatpush1.bf16.msra.mxu0 %v461
        %563 = vmatprep.subr.bf16.mxu0 0
        %564 = vmatpush1.bf16.msra.mxu0 %v460
        %565 = vmatprep.subr.bf16.mxu0 0
        %566 = vmatpush2.bf16.msra.mxu0 %v475
        %567 = vmatprep.subr.bf16.mxu0 0
        %568 = vmatpush2.bf16.msra.mxu0 %v474
        %569 = vmatprep.subr.bf16.mxu0 0
        %570 = vmatpush2.bf16.msra.mxu0 %v473
        %571 = vmatprep.subr.bf16.mxu0 0
        %572 = vmatpush2.bf16.msra.mxu0 %v472
        %573 = vmatprep.subr.bf16.mxu0 0
        %574 = vmatpush2.bf16.msra.mxu0 %v471
        %575 = vmatprep.subr.bf16.mxu0 0
        %576 = vmatpush2.bf16.msra.mxu0 %v470
        %577 = vmatprep.subr.bf16.mxu0 0
        %578 = vmatpush2.bf16.msra.mxu0 %v469
        %579 = vmatprep.subr.bf16.mxu0 0
        %580 = vmatpush2.bf16.msra.mxu0 %v468
        %581 = vmatprep.mubr.bf16.mxu0 %v311
        %582 = vmatmul.mubr.bf16.gmra.mxu0 %v310
        %v583 = vpop.f32.mrf.mxu0
        %v584 = vadd.f32 %v543, %v583
        %v585 = vpop.f32.mrf.mxu0
        %v586 = vpop.f32.mrf.mxu0
        %v587 = vadd.f32 %v546, %v586
        %v588 = vpop.f32.mrf.mxu0
        %589 = vdwg.mxu0
        %vm590 = vcmask 261120
        %591 = vst.msk [vmem:[%s204] sm:$0xff] %vm590, %v584
        %592 = vst.msk [vmem:[%s204 + $0x8] sm:$0xff] %vm590, %v587
        %s593 = sand.u32 %s117, 1
        %s594 = scalar_lea.sflag [#allocation3], %s593
        %s595 = sand.u32 %s117, 1
        %s596 = smul.addr %s595, 16
        %s597 = scalar_lea.vmem [#allocation2], %s596
        // Predicated region
        $region33: #{tpu_custom_call.1} parent=31 // pred_check
          %p598 = pneg %p127
        $region34: #{tpu_custom_call.1} parent=31 // pred_check_branch
          %600 = sbr.rel (%p598) target = $region36
        $region35: #{tpu_custom_call.1} parent=31 // pred_region
          %s601 = smul.u32 2, %s22
          %s603 = ssub.s32 256, 256
          %604 = vsyncadd %s594, %s603
          %s605 = sadd.s32 %s21, %s601
          %s606 = smul.addr %s605, 128
          %s607 = scalar_lea.hbm %s3, %s606
          %s608 = sshll.u32 %s597, 4
          %s609 = int_to_ptr.vmem [resolvable:$true] %s608
          %614 = dma.vmem_to_hbm [thread:$0]  %s609, 256, %s607, %s594, 128, 128, 8
        $region36: #{tpu_custom_call.1} parent=31 // pred_fallthru
          _
      $region32: #{tpu_custom_call.1} parent=5 // pred_fallthru
        _
      %p615 = scmp.le.s32.totalorder 2, %s12
      // Predicated region
      $region37: #{tpu_custom_call.1} parent=5 // pred_check
        %p616 = pneg %p615
      $region38: #{tpu_custom_call.1} parent=5 // pred_check_branch
        %618 = sbr.rel (%p616) target = $region40
      $region39: #{tpu_custom_call.1} parent=5 // pred_region
        %s619 = ssub.s32 %s12, 2
        // Predicated region
        $region41: #{tpu_custom_call.1} parent=39 // pred_check
          %p620 = pneg %p133
        $region42: #{tpu_custom_call.1} parent=39 // pred_check_branch
          %622 = sbr.rel (%p620) target = $region44
        $region43: #{tpu_custom_call.1} parent=39 // pred_region
          %s623 = sand.u32 %s118, 1
          %s624 = scalar_lea.sflag [#allocation3], %s623
          %s625 = sand.u32 %s118, 1
          %s626 = smul.addr %s625, 16
          %s627 = scalar_lea.vmem [#allocation2], %s626
          %628 = dma.done %s624, 256
        $region44: #{tpu_custom_call.1} parent=39 // pred_fallthru
          _
      $region40: #{tpu_custom_call.1} parent=5 // pred_fallthru
        _
    $region6: #{tpu_custom_call.1} parent=1 // loop_footer
      %s16 = sadd.s32 1, %s12
    $region7: #{tpu_custom_call.1} parent=1 // loop_footer_branch
      %11 = sbr.rel target = $region3
    $region8: #{tpu_custom_call.1} parent=1 // loop_exit
      _
    %629 = vsyncpa [#allocation3], 1
    %s630 = scalar_lea.sflag [#allocation3], 1
    %631 = vsyncpa %s630, 1

// kernel: tpu_custom_call.1
$region0: #{tpu_custom_call.1}
  #allocation0 [shape = 'u32[]', space=smem, size = 0x4, offset = 0x4, fixed_abs, tag = 'smem constant byte address 0x4 - core index']
  #allocation1 [shape = 'u32[144,128]{1,0:T(1,128)}', space=vmem, size = 0x12000, scoped, tag = 'internal scratch']
  %s0 = inlined_call_operand.vmem [shape: bf16[32,512], index: 0, kind: input, shape index: {}]
  %s1 = inlined_call_operand.vmem [shape: bf16[512,32], index: 1, kind: input, shape index: {}]
  %s2 = inlined_call_operand.vmem [shape: f32[1,32], index: 2, kind: input, shape index: {}]
  %s3 = inlined_call_operand.hbm [shape: f32[32,32], index: 3, kind: output, shape index: {}]
  %s4 = sld [smem:[#allocation0]]
  $region45: #{tpu_custom_call.1} parent=0
    _
  %s6 = ssub.s32 1, %s4
  %s7 = scalar_select 0, %s6, %s4
  $region1: #{tpu_custom_call.1} parent=0
    #allocation2 [shape = 'u8[16384]{0}', space=vmem, size = 0x4000, scoped, tag = 'output window, operand 0']
    #allocation3 [shape = 's32[2]{0}', space=sflag, size = 0x8, scoped, tag = 'scoped memory for tpu_custom_call.1']
    %8 = vsyncpa [#allocation3], 0
    %s9 = scalar_lea.sflag [#allocation3], 1
    %10 = vsyncpa %s9, 0
    loop: start=0, step=1, limit=4
    $region2: #{tpu_custom_call.1} parent=1 // loop_pre_header
      _
    $region3: #{tpu_custom_call.1} parent=1 // loop_header
      %s12 = sphi 0, %s16
      %p13 = scmp.ge.s32.totalorder %s12, 4
      %s19 = sphi 0, %s31
      %s20 = sphi 0, %s27
      %s21 = sphi 0, %s19
      %s22 = sphi 0, %s20
      %s23 = sphi 0, %s21
      %s24 = sphi 0, %s22
      %s34 = sphi 0, %s36
      %s37 = sphi 0, %s34
      %s38 = sphi 0, %s37
      %s54 = sphi 0, %s38
      %s60 = sphi 0, %s62
      %s63 = sphi 0, %s60
      %s64 = sphi 0, %s63
      %s80 = sphi 0, %s64
      %s86 = sphi 0, %s88
      %s89 = sphi 0, %s86
      %s90 = sphi 0, %s89
      %s106 = sphi 0, %s90
      %s114 = sphi 0, %s116
      %s117 = sphi 0, %s114
      %s118 = sphi 0, %s117
      %s134 = sphi 0, %s118
    $region4: #{tpu_custom_call.1} parent=1 // loop_header_branch
      %15 = sbr.rel (%p13) target = $region8
    $region5: #{tpu_custom_call.1} parent=1 // loop_body
      %s17 = ssub.s32 %s12, 1
      %s18 = ssub.s32 %s12, 2
      %s25 = sadd.s32 1, %s20
      %p26 = scmp.ge.s32.totalorder %s25, 2
      %s27 = scalar_select %p26, 0, %s25
      %s28 = sadd.s32 1, %s19
      %s29 = scalar_select %p26, %s28, %s19
      %p30 = scmp.ge.s32.totalorder %s29, 1
      %s31 = scalar_select %p30, 0, %s29
      %s32 = ssub.s32 %s20, %s27
      %p33 = scmp.eq.s32.totalorder %s32, 0
      %s35 = sadd.s32 %s34, 1
      %s36 = scalar_select %p33, %s34, %s35
      %p39 = pneg %p33
      %p40 = scmp.eq.s32.totalorder %s12, 1
      %p41 = por %p39, %p40
      %p42 = scmp.ne.s32.totalorder %s34, %s37
      %p43 = scmp.eq.s32.totalorder %s12, 0
      %p44 = por %p42, %p43
      %p45 = scmp.ne.s32.totalorder %s34, %s37
      %p46 = scmp.eq.s32.totalorder %s17, 1
      %p47 = por %p45, %p46
      %p48 = scmp.ne.s32.totalorder %s37, %s38
      %p49 = scmp.eq.s32.totalorder %s17, 0
      %p50 = por %p48, %p49
      %p51 = scmp.ne.s32.totalorder %s37, %s38
      %p52 = scmp.eq.s32.totalorder %s18, 1
      %p53 = por %p51, %p52
      %p55 = scmp.ne.s32.totalorder %s38, %s54
      %p56 = scmp.eq.s32.totalorder %s18, 0
      %p57 = por %p55, %p56
      %s58 = ssub.s32 %s19, %s31
      %p59 = scmp.eq.s32.totalorder %s58, 0
      %s61 = sadd.s32 %s60, 1
      %s62 = scalar_select %p59, %s60, %s61
      %p65 = pneg %p59
      %p66 = scmp.eq.s32.totalorder %s12, 1
      %p67 = por %p65, %p66
      %p68 = scmp.ne.s32.totalorder %s60, %s63
      %p69 = scmp.eq.s32.totalorder %s12, 0
      %p70 = por %p68, %p69
      %p71 = scmp.ne.s32.totalorder %s60, %s63
      %p72 = scmp.eq.s32.totalorder %s17, 1
      %p73 = por %p71, %p72
      %p74 = scmp.ne.s32.totalorder %s63, %s64
      %p75 = scmp.eq.s32.totalorder %s17, 0
      %p76 = por %p74, %p75
      %p77 = scmp.ne.s32.totalorder %s63, %s64
      %p78 = scmp.eq.s32.totalorder %s18, 1
      %p79 = por %p77, %p78
      %p81 = scmp.ne.s32.totalorder %s64, %s80
      %p82 = scmp.eq.s32.totalorder %s18, 0
      %p83 = por %p81, %p82
      %s84 = ssub.s32 %s19, %s31
      %p85 = scmp.eq.s32.totalorder %s84, 0
      %s87 = sadd.s32 %s86, 1
      %s88 = scalar_select %p85, %s86, %s87
      %p91 = pneg %p85
      %p92 = scmp.eq.s32.totalorder %s12, 1
      %p93 = por %p91, %p92
      %p94 = scmp.ne.s32.totalorder %s86, %s89
      %p95 = scmp.eq.s32.totalorder %s12, 0
      %p96 = por %p94, %p95
      %p97 = scmp.ne.s32.totalorder %s86, %s89
      %p98 = scmp.eq.s32.totalorder %s17, 1
      %p99 = por %p97, %p98
      %p100 = scmp.ne.s32.totalorder %s89, %s90
      %p101 = scmp.eq.s32.totalorder %s17, 0
      %p102 = por %p100, %p101
      %p103 = scmp.ne.s32.totalorder %s89, %s90
      %p104 = scmp.eq.s32.totalorder %s18, 1
      %p105 = por %p103, %p104
      %p107 = scmp.ne.s32.totalorder %s90, %s106
      %p108 = scmp.eq.s32.totalorder %s18, 0
      %p109 = por %p107, %p108
      %s110 = ssub.s32 %s20, %s27
      %s111 = ssub.s32 %s19, %s31
      %s112 = sor.u32 %s110, %s111
      %p113 = scmp.eq.s32.totalorder %s112, 0
      %s115 = sadd.s32 %s114, 1
      %s116 = scalar_select %p113, %s114, %s115
      %p119 = pneg %p113
      %p120 = scmp.eq.s32.totalorder %s12, 1
      %p121 = por %p119, %p120
      %p122 = scmp.ne.s32.totalorder %s114, %s117
      %p123 = scmp.eq.s32.totalorder %s12, 0
      %p124 = por %p122, %p123
      %p125 = scmp.ne.s32.totalorder %s114, %s117
      %p126 = scmp.eq.s32.totalorder %s17, 1
      %p127 = por %p125, %p126
      %p128 = scmp.ne.s32.totalorder %s117, %s118
      %p129 = scmp.eq.s32.totalorder %s17, 0
      %p130 = por %p128, %p129
      %p131 = scmp.ne.s32.totalorder %s117, %s118
      %p132 = scmp.eq.s32.totalorder %s18, 1
      %p133 = por %p131, %p132
      %p135 = scmp.ne.s32.totalorder %s118, %s134
      %p136 = scmp.eq.s32.totalorder %s18, 0
      %p137 = por %p135, %p136
      %p138 = scmp.le.s32.totalorder 1, %s12
      %p139 = scmp.lt.s32.totalorder %s12, 3
      %p140 = pnand %p138, %p139
      %p141 = pneg %p140
      // Predicated region
      $region9: #{tpu_custom_call.1} parent=5 // pred_check
        _
      $region10: #{tpu_custom_call.1} parent=5 // pred_check_branch
        %143 = sbr.rel (%p140) target = $region12
      $region11: #{tpu_custom_call.1} parent=5 // pred_region
        %s144 = ssub.s32 %s12, 1
        // Predicated region
        $region13: #{tpu_custom_call.1} parent=11 // pred_check
          %p145 = pneg %p76
        $region14: #{tpu_custom_call.1} parent=11 // pred_check_branch
          %147 = sbr.rel (%p145) target = $region16
        $region15: #{tpu_custom_call.1} parent=11 // pred_region
          %p148 = scmp.lt.s32.totalorder %s21, 0
          %s149 = scalar_select %p148, %s21, 0
          %s150 = smul.addr %s149, 4
          %s151 = scalar_lea.vmem %s1, %s150
        $region16: #{tpu_custom_call.1} parent=11 // pred_fallthru
          _
        // Predicated region
        $region17: #{tpu_custom_call.1} parent=11 // pred_check
          %p152 = pneg %p102
        $region18: #{tpu_custom_call.1} parent=11 // pred_check_branch
          %154 = sbr.rel (%p152) target = $region20
        $region19: #{tpu_custom_call.1} parent=11 // pred_region
          %p155 = scmp.lt.s32.totalorder %s21, 0
          %s156 = scalar_select %p155, %s21, 0
          %s157 = scalar_lea.vmem %s2, %s156
        $region20: #{tpu_custom_call.1} parent=11 // pred_fallthru
          _
      $region12: #{tpu_custom_call.1} parent=5 // pred_fallthru
        _
      %p158 = scmp.lt.s32.totalorder %s12, 2
      // Predicated region
      $region21: #{tpu_custom_call.1} parent=5 // pred_check
        %p159 = pneg %p158
      $region22: #{tpu_custom_call.1} parent=5 // pred_check_branch
        %161 = sbr.rel (%p159) target = $region24
      $region23: #{tpu_custom_call.1} parent=5 // pred_region
        // Predicated region
        $region25: #{tpu_custom_call.1} parent=23 // pred_check
          %p162 = pneg %p44
        $region26: #{tpu_custom_call.1} parent=23 // pred_check_branch
          %164 = sbr.rel (%p162) target = $region28
        $region27: #{tpu_custom_call.1} parent=23 // pred_region
          %s165 = smul.u32 2, %s20
          %p166 = scmp.lt.s32.totalorder %s165, 3
          %s167 = scalar_select %p166, %s165, 3
          %s168 = smul.addr %s167, 4
          %s169 = smul.addr %s168, 4
          %s170 = scalar_lea.vmem %s0, %s169
          %s171 = smul.u32 2, %s20
        $region28: #{tpu_custom_call.1} parent=23 // pred_fallthru
          _
      $region24: #{tpu_custom_call.1} parent=5 // pred_fallthru
        _
      %p172 = scmp.le.s32.totalorder 1, %s12
      %p173 = scmp.lt.s32.totalorder %s12, 3
      %p174 = pnand %p172, %p173
      %p175 = pneg %p174
      // Predicated region
      $region29: #{tpu_custom_call.1} parent=5 // pred_check
        _
      $region30: #{tpu_custom_call.1} parent=5 // pred_check_branch
        %177 = sbr.rel (%p174) target = $region32
      $region31: #{tpu_custom_call.1} parent=5 // pred_region
        %s178 = ssub.s32 %s12, 1
        %s179 = smul.u32 2, %s22
        %p180 = scmp.lt.s32.totalorder %s179, 3
        %s181 = scalar_select %p180, %s179, 3
        %s182 = smul.addr %s181, 4
        %s183 = smul.addr %s182, 4
        %s184 = scalar_lea.vmem %s0, %s183
        %p185 = pneg %p50
        %p186 = pneg %p47
        %p187 = scmp.lt.s32.totalorder %s21, 0
        %s188 = scalar_select %p187, %s21, 0
        %s189 = smul.addr %s188, 4
        %s190 = scalar_lea.vmem %s1, %s189
        %p191 = pneg %p76
        %p192 = pneg %p73
        %p193 = scmp.lt.s32.totalorder %s21, 0
        %s194 = scalar_select %p193, %s21, 0
        %s195 = scalar_lea.vmem %s2, %s194
        %p196 = pneg %p102
        %p197 = pneg %p99
        %p198 = pneg %p130
        %p199 = pneg %p127
        %s200 = sand.u32 %s117, 1
        %s201 = scalar_lea.sflag [#allocation3], %s200
        %s202 = sand.u32 %s117, 1
        %s203 = smul.addr %s202, 16
        %s204 = scalar_lea.vmem [#allocation2], %s203
        %s205 = smul.u32 2, %s22
        %p206 = scmp.lt.s32.totalorder %s205, 3
        %s207 = scalar_select %p206, %s205, 3
        %s208 = smul.addr %s207, 4
        %s209 = smul.addr %s208, 4
        %s210 = scalar_lea.vmem %s0, %s209
        %s211 = smul.u32 2, %s22
        %p212 = scmp.lt.s32.totalorder %s21, 0
        %s213 = scalar_select %p212, %s21, 0
        %s214 = smul.addr %s213, 4
        %s215 = scalar_lea.vmem %s1, %s214
        %p216 = scmp.lt.s32.totalorder %s21, 0
        %s217 = scalar_select %p216, %s21, 0
        %s218 = scalar_lea.vmem %s2, %s217
        %s219 = smul.u32 2, %s22
        %v221 = vld [vmem:[%s210] sm:$0xff]
        %v222 = vld [vmem:[%s210 + $0x8] sm:$0xff]
        %v223 = vld [vmem:[%s210 + $0x10] sm:$0xff]
        %v224 = vld [vmem:[%s210 + $0x18] sm:$0xff]
        %v225 = vld [vmem:[%s215] sm:$0xf]
        %v226 = vld [vmem:[%s215 + $0x4] sm:$0xf]
        %v227 = vld [vmem:[%s215 + $0x8] sm:$0xf]
        %v228 = vld [vmem:[%s215 + $0xc] sm:$0xf]
        %v229 = vld [vmem:[%s215 + $0x10] sm:$0xf]
        %v230 = vld [vmem:[%s215 + $0x14] sm:$0xf]
        %v231 = vld [vmem:[%s215 + $0x18] sm:$0xf]
        %v232 = vld [vmem:[%s215 + $0x1c] sm:$0xf]
        %v233 = vld [vmem:[%s215 + $0x20] sm:$0xf]
        %v234 = vld [vmem:[%s215 + $0x24] sm:$0xf]
        %v235 = vld [vmem:[%s215 + $0x28] sm:$0xf]
        %v236 = vld [vmem:[%s215 + $0x2c] sm:$0xf]
        %v237 = vld [vmem:[%s215 + $0x30] sm:$0xf]
        %v238 = vld [vmem:[%s215 + $0x34] sm:$0xf]
        %v239 = vld [vmem:[%s215 + $0x38] sm:$0xf]
        %v240 = vld [vmem:[%s215 + $0x3c] sm:$0xf]
        %v241 = vld [vmem:[%s215 + $0x40] sm:$0xf]
        %v242 = vld [vmem:[%s215 + $0x44] sm:$0xf]
        %v243 = vld [vmem:[%s215 + $0x48] sm:$0xf]
        %v244 = vld [vmem:[%s215 + $0x4c] sm:$0xf]
        %v245 = vld [vmem:[%s215 + $0x50] sm:$0xf]
        %v246 = vld [vmem:[%s215 + $0x54] sm:$0xf]
        %v247 = vld [vmem:[%s215 + $0x58] sm:$0xf]
        %v248 = vld [vmem:[%s215 + $0x5c] sm:$0xf]
        %v249 = vld [vmem:[%s215 + $0x60] sm:$0xf]
        %v250 = vld [vmem:[%s215 + $0x64] sm:$0xf]
        %v251 = vld [vmem:[%s215 + $0x68] sm:$0xf]
        %v252 = vld [vmem:[%s215 + $0x6c] sm:$0xf]
        %v253 = vld [vmem:[%s215 + $0x70] sm:$0xf]
        %v254 = vld [vmem:[%s215 + $0x74] sm:$0xf]
        %v255 = vld [vmem:[%s215 + $0x78] sm:$0xf]
        %v256 = vld [vmem:[%s215 + $0x7c] sm:$0xf]
        %v257 = vld [vmem:[%s215 + $0x80] sm:$0xf]
        %v258 = vld [vmem:[%s215 + $0x84] sm:$0xf]
        %v259 = vld [vmem:[%s215 + $0x88] sm:$0xf]
        %v260 = vld [vmem:[%s215 + $0x8c] sm:$0xf]
        %v261 = vld [vmem:[%s215 + $0x90] sm:$0xf]
        %v262 = vld [vmem:[%s215 + $0x94] sm:$0xf]
        %v263 = vld [vmem:[%s215 + $0x98] sm:$0xf]
        %v264 = vld [vmem:[%s215 + $0x9c] sm:$0xf]
        %v265 = vld [vmem:[%s215 + $0xa0] sm:$0xf]
        %v266 = vld [vmem:[%s215 + $0xa4] sm:$0xf]
        %v267 = vld [vmem:[%s215 + $0xa8] sm:$0xf]
        %v268 = vld [vmem:[%s215 + $0xac] sm:$0xf]
        %v269 = vld [vmem:[%s215 + $0xb0] sm:$0xf]
        %v270 = vld [vmem:[%s215 + $0xb4] sm:$0xf]
        %v271 = vld [vmem:[%s215 + $0xb8] sm:$0xf]
        %v272 = vld [vmem:[%s215 + $0xbc] sm:$0xf]
        %v273 = vld [vmem:[%s215 + $0xc0] sm:$0xf]
        %v274 = vld [vmem:[%s215 + $0xc4] sm:$0xf]
        %v275 = vld [vmem:[%s215 + $0xc8] sm:$0xf]
        %v276 = vld [vmem:[%s215 + $0xcc] sm:$0xf]
        %v277 = vld [vmem:[%s215 + $0xd0] sm:$0xf]
        %v278 = vld [vmem:[%s215 + $0xd4] sm:$0xf]
        %v279 = vld [vmem:[%s215 + $0xd8] sm:$0xf]
        %v280 = vld [vmem:[%s215 + $0xdc] sm:$0xf]
        %v281 = vld [vmem:[%s215 + $0xe0] sm:$0xf]
        %v282 = vld [vmem:[%s215 + $0xe4] sm:$0xf]
        %v283 = vld [vmem:[%s215 + $0xe8] sm:$0xf]
        %v284 = vld [vmem:[%s215 + $0xec] sm:$0xf]
        %v285 = vld [vmem:[%s215 + $0xf0] sm:$0xf]
        %v286 = vld [vmem:[%s215 + $0xf4] sm:$0xf]
        %v287 = vld [vmem:[%s215 + $0xf8] sm:$0xf]
        %v288 = vld [vmem:[%s215 + $0xfc] sm:$0xf]
        %v289 = vld [vmem:[%s218] sm:$0x1]
        %v291 = vlaneseq
        %v292 = vshrl.u32 %v291, 7
        %v293 = vsub.s32 0, %v292
        %v294 = vrot.slane %v289, %v293
        %v300 = vunpack.c.l.b16 %v221
        %v301 = vunpack.c.h.b16 %v221
        %v302 = vunpack.c.l.b16 %v222
        %v303 = vunpack.c.h.b16 %v222
        %v304 = vunpack.c.l.b16 %v223
        %v305 = vunpack.c.h.b16 %v223
        %v306 = vunpack.c.l.b16 %v224
        %v307 = vunpack.c.h.b16 %v224
        %v308 = vpack.c.b16 %v304, %v300
        %v309 = vpack.c.b16 %v305, %v301
        %v310 = vpack.c.b16 %v306, %v302
        %v311 = vpack.c.b16 %v307, %v303
        %v380 = vunpack.c.l.b16 %v225
        %v381 = vunpack.c.l.b16 %v226
        %v382 = vunpack.c.l.b16 %v227
        %v383 = vunpack.c.l.b16 %v228
        %v384 = vunpack.c.l.b16 %v229
        %v385 = vunpack.c.l.b16 %v230
        %v386 = vunpack.c.l.b16 %v231
        %v387 = vunpack.c.l.b16 %v232
        %v388 = vunpack.c.l.b16 %v233
        %v389 = vunpack.c.l.b16 %v234
        %v390 = vunpack.c.l.b16 %v235
        %v391 = vunpack.c.l.b16 %v236
        %v392 = vunpack.c.l.b16 %v237
        %v393 = vunpack.c.l.b16 %v238
        %v394 = vunpack.c.l.b16 %v239
        %v395 = vunpack.c.l.b16 %v240
        %v396 = vunpack.c.l.b16 %v241
        %v397 = vunpack.c.l.b16 %v242
        %v398 = vunpack.c.l.b16 %v243
        %v399 = vunpack.c.l.b16 %v244
        %v400 = vunpack.c.l.b16 %v245
        %v401 = vunpack.c.l.b16 %v246
        %v402 = vunpack.c.l.b16 %v247
        %v403 = vunpack.c.l.b16 %v248
        %v404 = vunpack.c.l.b16 %v249
        %v405 = vunpack.c.l.b16 %v250
        %v406 = vunpack.c.l.b16 %v251
        %v407 = vunpack.c.l.b16 %v252
        %v408 = vunpack.c.l.b16 %v253
        %v409 = vunpack.c.l.b16 %v254
        %v410 = vunpack.c.l.b16 %v255
        %v411 = vunpack.c.l.b16 %v256
        %v412 = vunpack.c.l.b16 %v257
        %v413 = vunpack.c.l.b16 %v258
        %v414 = vunpack.c.l.b16 %v259
        %v415 = vunpack.c.l.b16 %v260
        %v416 = vunpack.c.l.b16 %v261
        %v417 = vunpack.c.l.b16 %v262
        %v418 = vunpack.c.l.b16 %v263
        %v419 = vunpack.c.l.b16 %v264
        %v420 = vunpack.c.l.b16 %v265
        %v421 = vunpack.c.l.b16 %v266
        %v422 = vunpack.c.l.b16 %v267
        %v423 = vunpack.c.l.b16 %v268
        %v424 = vunpack.c.l.b16 %v269
        %v425 = vunpack.c.l.b16 %v270
        %v426 = vunpack.c.l.b16 %v271
        %v427 = vunpack.c.l.b16 %v272
        %v428 = vunpack.c.l.b16 %v273
        %v429 = vunpack.c.l.b16 %v274
        %v430 = vunpack.c.l.b16 %v275
        %v431 = vunpack.c.l.b16 %v276
        %v432 = vunpack.c.l.b16 %v277
        %v433 = vunpack.c.l.b16 %v278
        %v434 = vunpack.c.l.b16 %v279
        %v435 = vunpack.c.l.b16 %v280
        %v436 = vunpack.c.l.b16 %v281
        %v437 = vunpack.c.l.b16 %v282
        %v438 = vunpack.c.l.b16 %v283
        %v439 = vunpack.c.l.b16 %v284
        %v440 = vunpack.c.l.b16 %v285
        %v441 = vunpack.c.l.b16 %v286
        %v442 = vunpack.c.l.b16 %v287
        %v443 = vunpack.c.l.b16 %v288
        %v444 = vpack.c.b16 %v381, %v380
        %v445 = vpack.c.b16 %v383, %v382
        %v446 = vpack.c.b16 %v385, %v384
        %v447 = vpack.c.b16 %v387, %v386
        %v448 = vpack.c.b16 %v389, %v388
        %v449 = vpack.c.b16 %v391, %v390
        %v450 = vpack.c.b16 %v393, %v392
        %v451 = vpack.c.b16 %v395, %v394
        %v452 = vpack.c.b16 %v397, %v396
        %v453 = vpack.c.b16 %v399, %v398
        %v454 = vpack.c.b16 %v401, %v400
        %v455 = vpack.c.b16 %v403, %v402
        %v456 = vpack.c.b16 %v405, %v404
        %v457 = vpack.c.b16 %v407, %v406
        %v458 = vpack.c.b16 %v409, %v408
        %v459 = vpack.c.b16 %v411, %v410
        %v460 = vpack.c.b16 %v413, %v412
        %v461 = vpack.c.b16 %v415, %v414
        %v462 = vpack.c.b16 %v417, %v416
        %v463 = vpack.c.b16 %v419, %v418
        %v464 = vpack.c.b16 %v421, %v420
        %v465 = vpack.c.b16 %v423, %v422
        %v466 = vpack.c.b16 %v425, %v424
        %v467 = vpack.c.b16 %v427, %v426
        %v468 = vpack.c.b16 %v429, %v428
        %v469 = vpack.c.b16 %v431, %v430
        %v470 = vpack.c.b16 %v433, %v432
        %v471 = vpack.c.b16 %v435, %v434
        %v472 = vpack.c.b16 %v437, %v436
        %v473 = vpack.c.b16 %v439, %v438
        %v474 = vpack.c.b16 %v441, %v440
        %v475 = vpack.c.b16 %v443, %v442
        %508 = vmatprep.subr.bf16.mxu0 0
        %509 = vmatpush1.bf16.msra.mxu0 %v451
        %510 = vmatprep.subr.bf16.mxu0 0
        %511 = vmatpush1.bf16.msra.mxu0 %v450
        %512 = vmatprep.subr.bf16.mxu0 0
        %513 = vmatpush1.bf16.msra.mxu0 %v449
        %514 = vmatprep.subr.bf16.mxu0 0
        %515 = vmatpush1.bf16.msra.mxu0 %v448
        %516 = vmatprep.subr.bf16.mxu0 0
        %517 = vmatpush1.bf16.msra.mxu0 %v447
        %518 = vmatprep.subr.bf16.mxu0 0
        %519 = vmatpush1.bf16.msra.mxu0 %v446
        %520 = vmatprep.subr.bf16.mxu0 0
        %521 = vmatpush1.bf16.msra.mxu0 %v445
        %522 = vmatprep.subr.bf16.mxu0 0
        %523 = vmatpush1.bf16.msra.mxu0 %v444
        %524 = vmatprep.subr.bf16.mxu0 0
        %525 = vmatpush2.bf16.msra.mxu0 %v459
        %526 = vmatprep.subr.bf16.mxu0 0
        %527 = vmatpush2.bf16.msra.mxu0 %v458
        %528 = vmatprep.subr.bf16.mxu0 0
        %529 = vmatpush2.bf16.msra.mxu0 %v457
        %530 = vmatprep.subr.bf16.mxu0 0
        %531 = vmatpush2.bf16.msra.mxu0 %v456
        %532 = vmatprep.subr.bf16.mxu0 0
        %533 = vmatpush2.bf16.msra.mxu0 %v455
        %534 = vmatprep.subr.bf16.mxu0 0
        %535 = vmatpush2.bf16.msra.mxu0 %v454
        %536 = vmatprep.subr.bf16.mxu0 0
        %537 = vmatpush2.bf16.msra.mxu0 %v453
        %538 = vmatprep.subr.bf16.mxu0 0
        %539 = vmatpush2.bf16.msra.mxu0 %v452
        %540 = vmatprep.mubr.bf16.mxu0 %v309
        %541 = vmatmul.mubr.bf16.gmra.mxu0 %v308
        %v542 = vpop.f32.mrf.mxu0
        %v543 = vadd.f32 %v294, %v542
        %v544 = vpop.f32.mrf.mxu0
        %v545 = vpop.f32.mrf.mxu0
        %v546 = vadd.f32 %v294, %v545
        %v547 = vpop.f32.mrf.mxu0
        %548 = vdwg.mxu0
        %549 = vmatprep.subr.bf16.mxu0 0
        %550 = vmatpush1.bf16.msra.mxu0 %v467
        %551 = vmatprep.subr.bf16.mxu0 0
        %552 = vmatpush1.bf16.msra.mxu0 %v466
        %553 = vmatprep.subr.bf16.mxu0 0
        %554 = vmatpush1.bf16.msra.mxu0 %v465
        %555 = vmatprep.subr.bf16.mxu0 0
        %556 = vmatpush1.bf16.msra.mxu0 %v464
        %557 = vmatprep.subr.bf16.mxu0 0
        %558 = vmatpush1.bf16.msra.mxu0 %v463
        %559 = vmatprep.subr.bf16.mxu0 0
        %560 = vmatpush1.bf16.msra.mxu0 %v462
        %561 = vmatprep.subr.bf16.mxu0 0
        %562 = vmatpush1.bf16.msra.mxu0 %v461
        %563 = vmatprep.subr.bf16.mxu0 0
        %564 = vmatpush1.bf16.msra.mxu0 %v460
        %565 = vmatprep.subr.bf16.mxu0 0
        %566 = vmatpush2.bf16.msra.mxu0 %v475
        %567 = vmatprep.subr.bf16.mxu0 0
        %568 = vmatpush2.bf16.msra.mxu0 %v474
        %569 = vmatprep.subr.bf16.mxu0 0
        %570 = vmatpush2.bf16.msra.mxu0 %v473
        %571 = vmatprep.subr.bf16.mxu0 0
        %572 = vmatpush2.bf16.msra.mxu0 %v472
        %573 = vmatprep.subr.bf16.mxu0 0
        %574 = vmatpush2.bf16.msra.mxu0 %v471
        %575 = vmatprep.subr.bf16.mxu0 0
        %576 = vmatpush2.bf16.msra.mxu0 %v470
        %577 = vmatprep.subr.bf16.mxu0 0
        %578 = vmatpush2.bf16.msra.mxu0 %v469
        %579 = vmatprep.subr.bf16.mxu0 0
        %580 = vmatpush2.bf16.msra.mxu0 %v468
        %581 = vmatprep.mubr.bf16.mxu0 %v311
        %582 = vmatmul.mubr.bf16.gmra.mxu0 %v310
        %v583 = vpop.f32.mrf.mxu0
        %v584 = vadd.f32 %v543, %v583
        %v585 = vpop.f32.mrf.mxu0
        %v586 = vpop.f32.mrf.mxu0
        %v587 = vadd.f32 %v546, %v586
        %v588 = vpop.f32.mrf.mxu0
        %589 = vdwg.mxu0
        %vm590 = vcmask 261120
        %591 = vst.msk [vmem:[%s204] sm:$0xff] %vm590, %v584
        %592 = vst.msk [vmem:[%s204 + $0x8] sm:$0xff] %vm590, %v587
        %s593 = sand.u32 %s117, 1
        %s594 = scalar_lea.sflag [#allocation3], %s593
        %s595 = sand.u32 %s117, 1
        %s596 = smul.addr %s595, 16
        %s597 = scalar_lea.vmem [#allocation2], %s596
        // Predicated region
        $region33: #{tpu_custom_call.1} parent=31 // pred_check
          %p598 = pneg %p127
        $region34: #{tpu_custom_call.1} parent=31 // pred_check_branch
          %600 = sbr.rel (%p598) target = $region36
        $region35: #{tpu_custom_call.1} parent=31 // pred_region
          %s601 = smul.u32 2, %s22
          %s603 = ssub.s32 256, 256
          %604 = vsyncadd %s594, %s603
          %s605 = sadd.s32 %s21, %s601
          %s606 = smul.addr %s605, 128
          %s607 = scalar_lea.hbm %s3, %s606
          %s608 = sshll.u32 %s597, 4
          %s609 = int_to_ptr.vmem [resolvable:$true] %s608
          %614 = dma.vmem_to_hbm [thread:$0]  %s609, 256, %s607, %s594, 128, 128, 8
        $region36: #{tpu_custom_call.1} parent=31 // pred_fallthru
          _
      $region32: #{tpu_custom_call.1} parent=5 // pred_fallthru
        _
      %p615 = scmp.le.s32.totalorder 2, %s12
      // Predicated region
      $region37: #{tpu_custom_call.1} parent=5 // pred_check
        %p616 = pneg %p615
      $region38: #{tpu_custom_call.1} parent=5 // pred_check_branch
        %618 = sbr.rel (%p616) target = $region40
      $region39: #{tpu_custom_call.1} parent=5 // pred_region
        %s619 = ssub.s32 %s12, 2
        // Predicated region
        $region41: #{tpu_custom_call.1} parent=39 // pred_check
          %p620 = pneg %p133
        $region42: #{tpu_custom_call.1} parent=39 // pred_check_branch
          %622 = sbr.rel (%p620) target = $region44
        $region43: #{tpu_custom_call.1} parent=39 // pred_region
          %s623 = sand.u32 %s118, 1
          %s624 = scalar_lea.sflag [#allocation3], %s623
          %s625 = sand.u32 %s118, 1
          %s626 = smul.addr %s625, 16
          %s627 = scalar_lea.vmem [#allocation2], %s626
          %628 = dma.done %s624, 256
        $region44: #{tpu_custom_call.1} parent=39 // pred_fallthru
          _
      $region40: #{tpu_custom_call.1} parent=5 // pred_fallthru
        _
    $region6: #{tpu_custom_call.1} parent=1 // loop_footer
      %s16 = sadd.s32 1, %s12
    $region7: #{tpu_custom_call.1} parent=1 // loop_footer_branch
      %11 = sbr.rel target = $region3
    $region8: #{tpu_custom_call.1} parent=1 // loop_exit
      _
    %629 = vsyncpa [#allocation3], 1
    %s630 = scalar_lea.sflag [#allocation3], 1
    %631 = vsyncpa %s630, 1

</llo_original>
